<compile_context>
chip_gen: v6e
topology: v6e:2x2x1
jax: 0.10.0
libtpu: 0.0.40
codegen_flags: <defaults>
</compile_context>

<pallas_src>
import math

import jax
import jax.numpy as jnp
from jax.experimental import pallas as pl
from jax.experimental.pallas import tpu as pltpu

_MAX_LANE = 2048                        # preferred lane-dense slab width
_TARGET_TILE_BYTES = 8 * 1024 * 1024    # ~8 MiB per buffer per direction


def quad_kernel(coef_ref, x_ref, o_ref):
    # coef_ref: SMEM (3,) f32 -> a, b, c scalars (stay on the scalar path).
    a = coef_ref[0]
    b = coef_ref[1]
    c = coef_ref[2]
    x = x_ref[...]
    # Horner form: 2 mul + 2 add per element (vs 3 mul + 2 add).
    o_ref[...] = ((a * x + b) * x + c).astype(o_ref.dtype)


def _sublane_multiple(itemsize):
    # f32 -> 8 sublanes, bf16 -> 16, int8/fp8 -> 32.
    return max(8, 32 // itemsize)


def _pick_tm(rows, sub, lane, itemsize):
    """Row-tile: ~8 MiB, sublane-aligned, prefers dividing rows, grid >= 2."""
    if rows < 2 * sub:
        return rows                      # single whole-array block
    cap = _TARGET_TILE_BYTES // (lane * itemsize)
    cap = max(sub, (cap // sub) * sub)
    cap = min(cap, (rows // sub) * sub)
    # Keep at least 2 grid steps so both v7x TensorCores get work.
    cap = min(cap, max(sub, ((rows // 2) // sub) * sub))
    for tm in range(cap, sub - 1, -sub):
        if rows % tm == 0:               # unmasked last block if possible
            return tm
    return cap


def quadratic_regression(x, a, b, c):
    orig_shape = x.shape
    dtype = x.dtype
    n = x.size
    itemsize = jnp.dtype(dtype).itemsize

    # Parameters as a (3,) f32 SMEM array (matches torch f32 parameters).
    coef = jnp.stack([
        jnp.asarray(a, jnp.float32).reshape(()),
        jnp.asarray(b, jnp.float32).reshape(()),
        jnp.asarray(c, jnp.float32).reshape(()),
    ])

    x_flat = x.reshape(-1)               # metadata-only
    pad = 0
    lane = math.gcd(n, _MAX_LANE)
    if lane >= 128:
        # Zero-copy lane-dense view: lane divides n, multiple of 128.
        rows = n // lane
        x2d = x_flat.reshape(rows, lane)
    else:
        # TODO(synk): handle the ragged (< multiple-of-128) tail in-kernel with
        # a masked store instead of this padded copy; only hit for odd sizes.
        lane = _MAX_LANE
        rows = pl.cdiv(n, lane)
        pad = rows * lane - n
        x_flat = jnp.pad(x_flat, (0, pad))
        x2d = x_flat.reshape(rows, lane)

    sub = _sublane_multiple(itemsize)
    tm = _pick_tm(rows, sub, lane, itemsize)
    grid = (pl.cdiv(rows, tm),)

    tile_bytes = tm * lane * itemsize
    # Double-buffered input + output (~4 tiles) plus compiler-scratch margin.
    vmem_limit = max(16 * 1024 * 1024, 4 * tile_bytes + 8 * 1024 * 1024)

    out2d = pl.pallas_call(
        quad_kernel,
        out_shape=jax.ShapeDtypeStruct((rows, lane), dtype),
        grid=grid,
        in_specs=[
            pl.BlockSpec(memory_space=pltpu.MemorySpace.SMEM),  # coefficients
            pl.BlockSpec((tm, lane), lambda i: (i, 0)),         # x row-tile
        ],
        out_specs=pl.BlockSpec((tm, lane), lambda i: (i, 0)),
        compiler_params=pltpu.CompilerParams(
            dimension_semantics=("parallel",),   # shards across TCs on v7x
            vmem_limit_bytes=vmem_limit,
        ),
    )(coef, x2d)

    out = out2d.reshape(-1)
    if pad:
        out = out[:n]
    return out.reshape(orig_shape)


if __name__ == "__main__":
    key = jax.random.PRNGKey(0)
    kx, ka, kb, kc = jax.random.split(key, 4)

    # Module parameters: a, b, c ~ randn(1), as in QuadraticRegressionModel.
    a = jax.random.normal(ka, (1,), dtype=jnp.float32)
    b = jax.random.normal(kb, (1,), dtype=jnp.float32)
    c = jax.random.normal(kc, (1,), dtype=jnp.float32)

    # Small elementwise input; exercises the zero-copy path and a 2-step grid.
    M, N = 128, 256
    x = jax.random.normal(kx, (M, N), dtype=jnp.float32)

    y = quadratic_regression(x, a, b, c)
    y = jax.block_until_ready(y)

    # Reference in plain JAX (same math as the torch forward).
    y_ref = a * jnp.power(x, 2) + b * x + c
    assert y.shape == x.shape and y.dtype == x.dtype
    assert jnp.allclose(y, y_ref, atol=1e-5, rtol=1e-5)

    print("KERNEL_OK")
</pallas_src>

<mosaic_0001>
module attributes {stable_mosaic.version = 11 : i64} {
  func.func @quad_kernel(%arg0: i32, %arg1: memref<3xf32, #tpu.memory_space<smem>>, %arg2: memref<8x2048xf32, #tpu.memory_space<vmem>>, %arg3: memref<8x2048xf32, #tpu.memory_space<vmem>>) attributes {dimension_semantics = [#tpu.dimension_semantics<parallel>], iteration_bounds = array<i64: 2>, scalar_prefetch = 0 : i64, scratch_operands = 0 : i64, tpu.core_type = #tpu.core_type<tc>, window_params = [{transform_indices = @transform_0, window_bounds = array<i64: 3>}, {transform_indices = @transform_1, window_bounds = array<i64: 8, 2048>}, {transform_indices = @transform_2, window_bounds = array<i64: 8, 2048>}]} {
    %c0 = arith.constant 0 : index
    %0 = memref.load %arg1[%c0] : memref<3xf32, #tpu.memory_space<smem>>
    %c1 = arith.constant 1 : index
    %1 = memref.load %arg1[%c1] : memref<3xf32, #tpu.memory_space<smem>>
    %c2 = arith.constant 2 : index
    %2 = memref.load %arg1[%c2] : memref<3xf32, #tpu.memory_space<smem>>
    %c0_0 = arith.constant 0 : index
    %c0_1 = arith.constant 0 : index
    %3 = vector.load %arg2[%c0_0, %c0_1] : memref<8x2048xf32, #tpu.memory_space<vmem>>, vector<8x2048xf32>
    %4 = vector.broadcast %0 : f32 to vector<8x2048xf32>
    %5 = arith.mulf %4, %3 : vector<8x2048xf32>
    %6 = vector.broadcast %1 : f32 to vector<8x2048xf32>
    %7 = arith.addf %5, %6 : vector<8x2048xf32>
    %8 = arith.mulf %7, %3 : vector<8x2048xf32>
    %9 = vector.broadcast %2 : f32 to vector<8x2048xf32>
    %10 = arith.addf %8, %9 : vector<8x2048xf32>
    %c0_2 = arith.constant 0 : index
    %c0_3 = arith.constant 0 : index
    %11 = vector.load %arg3[%c0_2, %c0_3] : memref<8x2048xf32, #tpu.memory_space<vmem>>, vector<8x2048xf32>
    tpu.vector_store %arg3[%c0_2, %c0_3], %10 {strides = array<i32>} : memref<8x2048xf32, #tpu.memory_space<vmem>>, vector<8x2048xf32>,
    return
  }
  func.func @transform_0(%arg0: i32) -> i32 {
    %c0_i32 = arith.constant 0 : i32
    %c0_i32_0 = arith.constant 0 : i32
    return %c0_i32 : i32
  }
  func.func @transform_1(%arg0: i32) -> (i32, i32) {
    %c0_i32 = arith.constant 0 : i32
    %c0_i32_0 = arith.constant 0 : i32
    return %arg0, %c0_i32 : i32, i32
  }
  func.func @transform_2(%arg0: i32) -> (i32, i32) {
    %c0_i32 = arith.constant 0 : i32
    %c0_i32_0 = arith.constant 0 : i32
    return %arg0, %c0_i32 : i32, i32
  }
}

</mosaic_0001>

<llo_original>
// kernel: tpu_custom_call.1
$region0: #{tpu_custom_call.1}
  #allocation0 [shape = 'u32[]', space=smem, size = 0x4, offset = 0x4, fixed_abs, tag = 'smem constant byte address 0x4 - core index']
  #allocation1 [shape = 'u32[144,128]{1,0:T(1,128)}', space=vmem, size = 0x12000, scoped, tag = 'internal scratch']
  %s0 = inlined_call_operand.hbm [shape: f32[3], index: 0, kind: input, shape index: {}]
  %s1 = inlined_call_operand.hbm [shape: f32[16,2048], index: 1, kind: input, shape index: {}]
  %s2 = inlined_call_operand.hbm [shape: f32[16,2048], index: 2, kind: output, shape index: {}]
  %s3 = sld [smem:[#allocation0]]
  $region49: #{tpu_custom_call.1} parent=0
    _
  %s5 = ssub.s32 1, %s3
  %s6 = scalar_select 0, %s5, %s3
  $region1: #{tpu_custom_call.1} parent=0
    #allocation2 [shape = 'u8[512]{0}', space=smem, size = 0x200, scoped, tag = 'input window, operand 0, single buffered']
    #allocation3 [shape = 's32[2]{0}', space=sflag, size = 0x8, scoped, tag = 'scoped memory for tpu_custom_call.1']
    #allocation4 [shape = 's32[2]{0}', space=sflag, size = 0x8, scoped, tag = 'scoped memory for tpu_custom_call.1']
    #allocation5 [shape = 's32[2]{0}', space=sflag, size = 0x8, scoped, tag = 'scoped memory for tpu_custom_call.1']
    #allocation6 [shape = 'u8[131072]{0}', space=vmem, size = 0x20000, scoped, tag = 'input window, operand 1']
    #allocation7 [shape = 'u8[131072]{0}', space=vmem, size = 0x20000, scoped, tag = 'output window, operand 0']
    %7 = vsyncpa [#allocation5], 0
    %8 = vsyncpa [#allocation3], 0
    %s9 = scalar_lea.sflag [#allocation3], 1
    %10 = vsyncpa %s9, 0
    %11 = vsyncpa [#allocation4], 0
    %s12 = scalar_lea.sflag [#allocation4], 1
    %13 = vsyncpa %s12, 0
    loop: start=0, step=1, limit=4
    $region2: #{tpu_custom_call.1} parent=1 // loop_pre_header
      _
    $region3: #{tpu_custom_call.1} parent=1 // loop_header
      %s15 = sphi 0, %s19
      %p16 = scmp.ge.s32.totalorder %s15, 4
      %s23 = sphi 0, %s23
      %s25 = sphi 0, %s23
      %s26 = sphi 0, %s25
      %s40 = sphi 0, %s26
      %s46 = sphi 0, %s48
      %s49 = sphi 0, %s46
      %s50 = sphi 0, %s49
      %s66 = sphi 0, %s50
      %s72 = sphi 0, %s74
      %s75 = sphi 0, %s72
      %s76 = sphi 0, %s75
      %s92 = sphi 0, %s76
    $region4: #{tpu_custom_call.1} parent=1 // loop_header_branch
      %18 = sbr.rel (%p16) target = $region8
    $region5: #{tpu_custom_call.1} parent=1 // loop_body
      %s20 = ssub.s32 %s15, 1
      %s21 = ssub.s32 %s15, 2
      %s22 = sadd.s32 %s15, 1
      %s24 = sadd.s32 %s23, 1
      %p27 = scmp.eq.s32.totalorder %s15, 1
      %p28 = scmp.ne.s32.totalorder %s23, %s25
      %p29 = scmp.eq.s32.totalorder %s15, 0
      %p30 = por %p28, %p29
      %p31 = scmp.ne.s32.totalorder %s23, %s25
      %p32 = scmp.eq.s32.totalorder %s20, 1
      %p33 = por %p31, %p32
      %p34 = scmp.ne.s32.totalorder %s25, %s26
      %p35 = scmp.eq.s32.totalorder %s20, 0
      %p36 = por %p34, %p35
      %p37 = scmp.ne.s32.totalorder %s25, %s26
      %p38 = scmp.eq.s32.totalorder %s21, 1
      %p39 = por %p37, %p38
      %p41 = scmp.ne.s32.totalorder %s26, %s40
      %p42 = scmp.eq.s32.totalorder %s21, 0
      %p43 = por %p41, %p42
      %s44 = ssub.s32 %s15, %s22
      %p45 = scmp.eq.s32.totalorder %s44, 0
      %s47 = sadd.s32 %s46, 1
      %s48 = scalar_select %p45, %s46, %s47
      %p51 = pneg %p45
      %p52 = scmp.eq.s32.totalorder %s15, 1
      %p53 = por %p51, %p52
      %p54 = scmp.ne.s32.totalorder %s46, %s49
      %p55 = scmp.eq.s32.totalorder %s15, 0
      %p56 = por %p54, %p55
      %p57 = scmp.ne.s32.totalorder %s46, %s49
      %p58 = scmp.eq.s32.totalorder %s20, 1
      %p59 = por %p57, %p58
      %p60 = scmp.ne.s32.totalorder %s49, %s50
      %p61 = scmp.eq.s32.totalorder %s20, 0
      %p62 = por %p60, %p61
      %p63 = scmp.ne.s32.totalorder %s49, %s50
      %p64 = scmp.eq.s32.totalorder %s21, 1
      %p65 = por %p63, %p64
      %p67 = scmp.ne.s32.totalorder %s50, %s66
      %p68 = scmp.eq.s32.totalorder %s21, 0
      %p69 = por %p67, %p68
      %s70 = ssub.s32 %s15, %s22
      %p71 = scmp.eq.s32.totalorder %s70, 0
      %s73 = sadd.s32 %s72, 1
      %s74 = scalar_select %p71, %s72, %s73
      %p77 = pneg %p71
      %p78 = scmp.eq.s32.totalorder %s15, 1
      %p79 = por %p77, %p78
      %p80 = scmp.ne.s32.totalorder %s72, %s75
      %p81 = scmp.eq.s32.totalorder %s15, 0
      %p82 = por %p80, %p81
      %p83 = scmp.ne.s32.totalorder %s72, %s75
      %p84 = scmp.eq.s32.totalorder %s20, 1
      %p85 = por %p83, %p84
      %p86 = scmp.ne.s32.totalorder %s75, %s76
      %p87 = scmp.eq.s32.totalorder %s20, 0
      %p88 = por %p86, %p87
      %p89 = scmp.ne.s32.totalorder %s75, %s76
      %p90 = scmp.eq.s32.totalorder %s21, 1
      %p91 = por %p89, %p90
      %p93 = scmp.ne.s32.totalorder %s76, %s92
      %p94 = scmp.eq.s32.totalorder %s21, 0
      %p95 = por %p93, %p94
      %p96 = scmp.le.s32.totalorder 1, %s15
      %p97 = scmp.lt.s32.totalorder %s15, 3
      %p98 = pnand %p96, %p97
      %p99 = pneg %p98
      // Predicated region
      $region9: #{tpu_custom_call.1} parent=5 // pred_check
        _
      $region10: #{tpu_custom_call.1} parent=5 // pred_check_branch
        %101 = sbr.rel (%p98) target = $region12
      $region11: #{tpu_custom_call.1} parent=5 // pred_region
        %s102 = ssub.s32 %s15, 1
        // Predicated region
        $region13: #{tpu_custom_call.1} parent=11 // pred_check
          %p103 = pneg %p36
        $region14: #{tpu_custom_call.1} parent=11 // pred_check_branch
          %105 = sbr.rel (%p103) target = $region16
        $region15: #{tpu_custom_call.1} parent=11 // pred_region
          %s107 = ssub.s32 16, 16
          %108 = vsyncadd [#allocation5], %s107
          %111 = dma.hbm_to_smem %s0, 16, [#allocation2], [#allocation5]
        $region16: #{tpu_custom_call.1} parent=11 // pred_fallthru
          _
      $region12: #{tpu_custom_call.1} parent=5 // pred_fallthru
        _
      %p112 = scmp.lt.s32.totalorder %s15, 2
      // Predicated region
      $region17: #{tpu_custom_call.1} parent=5 // pred_check
        %p113 = pneg %p112
      $region18: #{tpu_custom_call.1} parent=5 // pred_check_branch
        %115 = sbr.rel (%p113) target = $region20
      $region19: #{tpu_custom_call.1} parent=5 // pred_region
        // Predicated region
        $region21: #{tpu_custom_call.1} parent=19 // pred_check
          %p116 = pneg %p56
        $region22: #{tpu_custom_call.1} parent=19 // pred_check_branch
          %118 = sbr.rel (%p116) target = $region24
        $region23: #{tpu_custom_call.1} parent=19 // pred_region
          %s119 = sand.u32 %s46, 1
          %s120 = scalar_lea.sflag [#allocation3], %s119
          %s121 = sand.u32 %s46, 1
          %s122 = smul.addr %s121, 128
          %s123 = scalar_lea.vmem [#allocation6], %s122
          %s125 = ssub.s32 2048, 2048
          %126 = vsyncadd %s120, %s125
          %s127 = smul.addr %s15, 16
          %s128 = smul.addr %s127, 128
          %s129 = scalar_lea.hbm %s1, %s128
          %s131 = sshll.u32 %s123, 4
          %s132 = int_to_ptr.vmem [resolvable:$true] %s131
          %134 = dma.hbm_to_vmem [thread:$0]  %s129, 2048, %s132, %s120
        $region24: #{tpu_custom_call.1} parent=19 // pred_fallthru
          _
      $region20: #{tpu_custom_call.1} parent=5 // pred_fallthru
        _
      %p135 = scmp.le.s32.totalorder 1, %s15
      %p136 = scmp.lt.s32.totalorder %s15, 3
      %p137 = pnand %p135, %p136
      %p138 = pneg %p137
      // Predicated region
      $region25: #{tpu_custom_call.1} parent=5 // pred_check
        _
      $region26: #{tpu_custom_call.1} parent=5 // pred_check_branch
        %140 = sbr.rel (%p137) target = $region28
      $region27: #{tpu_custom_call.1} parent=5 // pred_region
        %s141 = ssub.s32 %s15, 1
        // Predicated region
        $region29: #{tpu_custom_call.1} parent=27 // pred_check
          %p142 = pneg %p36
        $region30: #{tpu_custom_call.1} parent=27 // pred_check_branch
          %144 = sbr.rel (%p142) target = $region32
        $region31: #{tpu_custom_call.1} parent=27 // pred_region
          %145 = dma.done [#allocation5], 16
        $region32: #{tpu_custom_call.1} parent=27 // pred_fallthru
          _
        %s146 = sand.u32 %s49, 1
        %s147 = scalar_lea.sflag [#allocation3], %s146
        %s148 = sand.u32 %s49, 1
        %s149 = smul.addr %s148, 128
        %s150 = scalar_lea.vmem [#allocation6], %s149
        // Predicated region
        $region33: #{tpu_custom_call.1} parent=27 // pred_check
          %p151 = pneg %p62
        $region34: #{tpu_custom_call.1} parent=27 // pred_check_branch
          %153 = sbr.rel (%p151) target = $region36
        $region35: #{tpu_custom_call.1} parent=27 // pred_region
          %154 = dma.done %s147, 2048
        $region36: #{tpu_custom_call.1} parent=27 // pred_fallthru
          _
        %155 = sfence
        %p156 = pneg %p36
        %p157 = pneg %p33
        %s158 = sand.u32 %s49, 1
        %s159 = scalar_lea.sflag [#allocation3], %s158
        %s160 = sand.u32 %s49, 1
        %s161 = smul.addr %s160, 128
        %s162 = scalar_lea.vmem [#allocation6], %s161
        %p163 = pneg %p62
        %p164 = pneg %p59
        %p165 = pneg %p88
        %p166 = pneg %p85
        %s167 = sand.u32 %s75, 1
        %s168 = scalar_lea.sflag [#allocation4], %s167
        %s169 = sand.u32 %s75, 1
        %s170 = smul.addr %s169, 128
        %s171 = scalar_lea.vmem [#allocation7], %s170
        %s172 = sld [smem:[#allocation2]]
        %s173 = sld [smem:[#allocation2 + $0x1]]
        %s174 = sld [smem:[#allocation2 + $0x2]]
        %v175 = vld [vmem:[%s150] sm:$0xff]
        %v176 = vld [vmem:[%s150 + $0x8] sm:$0xff]
        %v177 = vld [vmem:[%s150 + $0x10] sm:$0xff]
        %v178 = vld [vmem:[%s150 + $0x18] sm:$0xff]
        %v179 = vld [vmem:[%s150 + $0x20] sm:$0xff]
        %v180 = vld [vmem:[%s150 + $0x28] sm:$0xff]
        %v181 = vld [vmem:[%s150 + $0x30] sm:$0xff]
        %v182 = vld [vmem:[%s150 + $0x38] sm:$0xff]
        %v183 = vld [vmem:[%s150 + $0x40] sm:$0xff]
        %v184 = vld [vmem:[%s150 + $0x48] sm:$0xff]
        %v185 = vld [vmem:[%s150 + $0x50] sm:$0xff]
        %v186 = vld [vmem:[%s150 + $0x58] sm:$0xff]
        %v187 = vld [vmem:[%s150 + $0x60] sm:$0xff]
        %v188 = vld [vmem:[%s150 + $0x68] sm:$0xff]
        %v189 = vld [vmem:[%s150 + $0x70] sm:$0xff]
        %v190 = vld [vmem:[%s150 + $0x78] sm:$0xff]
        %v191 = vstv %s172
        %v192 = vmul.f32 %v191, %v175
        %v193 = vmul.f32 %v191, %v176
        %v194 = vmul.f32 %v191, %v177
        %v195 = vmul.f32 %v191, %v178
        %v196 = vmul.f32 %v191, %v179
        %v197 = vmul.f32 %v191, %v180
        %v198 = vmul.f32 %v191, %v181
        %v199 = vmul.f32 %v191, %v182
        %v200 = vmul.f32 %v191, %v183
        %v201 = vmul.f32 %v191, %v184
        %v202 = vmul.f32 %v191, %v185
        %v203 = vmul.f32 %v191, %v186
        %v204 = vmul.f32 %v191, %v187
        %v205 = vmul.f32 %v191, %v188
        %v206 = vmul.f32 %v191, %v189
        %v207 = vmul.f32 %v191, %v190
        %v208 = vstv %s173
        %v209 = vadd.f32 %v192, %v208
        %v210 = vadd.f32 %v193, %v208
        %v211 = vadd.f32 %v194, %v208
        %v212 = vadd.f32 %v195, %v208
        %v213 = vadd.f32 %v196, %v208
        %v214 = vadd.f32 %v197, %v208
        %v215 = vadd.f32 %v198, %v208
        %v216 = vadd.f32 %v199, %v208
        %v217 = vadd.f32 %v200, %v208
        %v218 = vadd.f32 %v201, %v208
        %v219 = vadd.f32 %v202, %v208
        %v220 = vadd.f32 %v203, %v208
        %v221 = vadd.f32 %v204, %v208
        %v222 = vadd.f32 %v205, %v208
        %v223 = vadd.f32 %v206, %v208
        %v224 = vadd.f32 %v207, %v208
        %v225 = vmul.f32 %v209, %v175
        %v226 = vmul.f32 %v210, %v176
        %v227 = vmul.f32 %v211, %v177
        %v228 = vmul.f32 %v212, %v178
        %v229 = vmul.f32 %v213, %v179
        %v230 = vmul.f32 %v214, %v180
        %v231 = vmul.f32 %v215, %v181
        %v232 = vmul.f32 %v216, %v182
        %v233 = vmul.f32 %v217, %v183
        %v234 = vmul.f32 %v218, %v184
        %v235 = vmul.f32 %v219, %v185
        %v236 = vmul.f32 %v220, %v186
        %v237 = vmul.f32 %v221, %v187
        %v238 = vmul.f32 %v222, %v188
        %v239 = vmul.f32 %v223, %v189
        %v240 = vmul.f32 %v224, %v190
        %v241 = vstv %s174
        %v242 = vadd.f32 %v225, %v241
        %v243 = vadd.f32 %v226, %v241
        %v244 = vadd.f32 %v227, %v241
        %v245 = vadd.f32 %v228, %v241
        %v246 = vadd.f32 %v229, %v241
        %v247 = vadd.f32 %v230, %v241
        %v248 = vadd.f32 %v231, %v241
        %v249 = vadd.f32 %v232, %v241
        %v250 = vadd.f32 %v233, %v241
        %v251 = vadd.f32 %v234, %v241
        %v252 = vadd.f32 %v235, %v241
        %v253 = vadd.f32 %v236, %v241
        %v254 = vadd.f32 %v237, %v241
        %v255 = vadd.f32 %v238, %v241
        %v256 = vadd.f32 %v239, %v241
        %v257 = vadd.f32 %v240, %v241
        %258 = vst [vmem:[%s171] sm:$0xff] %v242
        %259 = vst [vmem:[%s171 + $0x8] sm:$0xff] %v243
        %260 = vst [vmem:[%s171 + $0x10] sm:$0xff] %v244
        %261 = vst [vmem:[%s171 + $0x18] sm:$0xff] %v245
        %262 = vst [vmem:[%s171 + $0x20] sm:$0xff] %v246
        %263 = vst [vmem:[%s171 + $0x28] sm:$0xff] %v247
        %264 = vst [vmem:[%s171 + $0x30] sm:$0xff] %v248
        %265 = vst [vmem:[%s171 + $0x38] sm:$0xff] %v249
        %266 = vst [vmem:[%s171 + $0x40] sm:$0xff] %v250
        %267 = vst [vmem:[%s171 + $0x48] sm:$0xff] %v251
        %268 = vst [vmem:[%s171 + $0x50] sm:$0xff] %v252
        %269 = vst [vmem:[%s171 + $0x58] sm:$0xff] %v253
        %270 = vst [vmem:[%s171 + $0x60] sm:$0xff] %v254
        %271 = vst [vmem:[%s171 + $0x68] sm:$0xff] %v255
        %272 = vst [vmem:[%s171 + $0x70] sm:$0xff] %v256
        %273 = vst [vmem:[%s171 + $0x78] sm:$0xff] %v257
        %s274 = sand.u32 %s75, 1
        %s275 = scalar_lea.sflag [#allocation4], %s274
        %s276 = sand.u32 %s75, 1
        %s277 = smul.addr %s276, 128
        %s278 = scalar_lea.vmem [#allocation7], %s277
        // Predicated region
        $region37: #{tpu_custom_call.1} parent=27 // pred_check
          %p279 = pneg %p85
        $region38: #{tpu_custom_call.1} parent=27 // pred_check_branch
          %281 = sbr.rel (%p279) target = $region40
        $region39: #{tpu_custom_call.1} parent=27 // pred_region
          %s283 = ssub.s32 2048, 2048
          %284 = vsyncadd %s275, %s283
          %s285 = smul.addr %s20, 16
          %s286 = smul.addr %s285, 128
          %s287 = scalar_lea.hbm %s2, %s286
          %s289 = sshll.u32 %s278, 4
          %s290 = int_to_ptr.vmem [resolvable:$true] %s289
          %292 = dma.vmem_to_hbm [thread:$0]  %s290, 2048, %s287, %s275
        $region40: #{tpu_custom_call.1} parent=27 // pred_fallthru
          _
      $region28: #{tpu_custom_call.1} parent=5 // pred_fallthru
        _
      %p293 = scmp.le.s32.totalorder 2, %s15
      // Predicated region
      $region41: #{tpu_custom_call.1} parent=5 // pred_check
        %p294 = pneg %p293
      $region42: #{tpu_custom_call.1} parent=5 // pred_check_branch
        %296 = sbr.rel (%p294) target = $region44
      $region43: #{tpu_custom_call.1} parent=5 // pred_region
        %s297 = ssub.s32 %s15, 2
        // Predicated region
        $region45: #{tpu_custom_call.1} parent=43 // pred_check
          %p298 = pneg %p91
        $region46: #{tpu_custom_call.1} parent=43 // pred_check_branch
          %300 = sbr.rel (%p298) target = $region48
        $region47: #{tpu_custom_call.1} parent=43 // pred_region
          %s301 = sand.u32 %s76, 1
          %s302 = scalar_lea.sflag [#allocation4], %s301
          %s303 = sand.u32 %s76, 1
          %s304 = smul.addr %s303, 128
          %s305 = scalar_lea.vmem [#allocation7], %s304
          %306 = dma.done %s302, 2048
        $region48: #{tpu_custom_call.1} parent=43 // pred_fallthru
          _
      $region44: #{tpu_custom_call.1} parent=5 // pred_fallthru
        _
    $region6: #{tpu_custom_call.1} parent=1 // loop_footer
      %s19 = sadd.s32 1, %s15
    $region7: #{tpu_custom_call.1} parent=1 // loop_footer_branch
      %14 = sbr.rel target = $region3
    $region8: #{tpu_custom_call.1} parent=1 // loop_exit
      _
    %307 = vsyncpa [#allocation3], 1
    %s308 = scalar_lea.sflag [#allocation3], 1
    %309 = vsyncpa %s308, 1
    %310 = vsyncpa [#allocation4], 1
    %s311 = scalar_lea.sflag [#allocation4], 1
    %312 = vsyncpa %s311, 1
    %313 = vsyncpa [#allocation5], 1
    %s314 = scalar_lea.sflag [#allocation5], 1
    %315 = vsyncpa %s314, 1

</llo_original>
